<compile_context>
chip_gen: v6e
topology: v6e:2x2x1
jax: 0.10.0
libtpu: 0.0.40
codegen_flags: <defaults>
</compile_context>

<pallas_src>
import functools
import math

import jax
import jax.numpy as jnp
from jax import lax
from jax.experimental import pallas as pl
from jax.experimental.pallas import tpu as pltpu


def _mha_kernel(q_ref, k_ref, v_ref, wq_ref, wk_ref, wv_ref,
                out_ref, attn_ref, ks_ref, vs_ref, *,
                n_heads, d_k, d_v, inv_scale, matmul_dtype, approx_recip):
    # q_ref    : (bq, d_model)            (batch dim squeezed by BlockSpec)
    # k_ref    : (Lk, d_model), v_ref : (Lk, d_model)
    # wq_ref   : (d_model, n_heads*d_k)   (head-fused weights)
    # wk_ref   : (d_model, n_heads*d_k)
    # wv_ref   : (d_model, n_heads*d_v)
    # out_ref  : (bq, n_heads*d_v)        (lane-dense head-fused output slab)
    # attn_ref : (n_heads, bq, Lk)
    # ks_ref   : (Lk, n_heads*d_k) VMEM scratch, persists across q tiles
    # vs_ref   : (Lk, n_heads*d_v) VMEM scratch

    # Project K/V only once per batch element: the q-tile axis (program_id(1))
    # is the innermost grid axis and k/v depend only on the batch index, so
    # the scratch stays valid for qi > 0.
    @pl.when(pl.program_id(1) == 0)
    def _():
        ks_ref[...] = jnp.dot(k_ref[...], wk_ref[...],
                              preferred_element_type=jnp.float32
                              ).astype(matmul_dtype)
        vs_ref[...] = jnp.dot(v_ref[...], wv_ref[...],
                              preferred_element_type=jnp.float32
                              ).astype(matmul_dtype)

    # Q projection for this q tile; fold 1/sqrt(d_k) into q_s (touches
    # bq*n_heads*d_k elements instead of bq*Lk).
    q_s = jnp.dot(q_ref[...], wq_ref[...], preferred_element_type=jnp.float32)
    q_s = (q_s * inv_scale).astype(matmul_dtype)

    k_s = ks_ref[...]
    v_s = vs_ref[...]

    for h in range(n_heads):  # n_heads is small & static -> unrolled
        qh = q_s[:, h * d_k:(h + 1) * d_k]
        kh = k_s[:, h * d_k:(h + 1) * d_k]
        # Contract the last dims of both operands directly; avoids an explicit
        # k.T (XLU transpose + intermediate VMEM copy).
        scores = lax.dot_general(
            qh, kh, dimension_numbers=(((1,), (1,)), ((), ())),
            preferred_element_type=jnp.float32)

        # Numerically stable softmax in f32 (matches torch.nn.Softmax(dim=-1)).
        m = jnp.max(scores, axis=-1, keepdims=True)
        p = jnp.exp(scores - m)
        denom = jnp.sum(p, axis=-1, keepdims=True)
        # Exact reciprocal in the f32-parity path; approx (EUP vrcp) in the
        # reduced-precision path where it is slot-free and inside the budget.
        attn = p * pl.reciprocal(denom, approx=approx_recip)

        attn_ref[h] = attn.astype(attn_ref.dtype)

        vh = v_s[:, h * d_v:(h + 1) * d_v]
        out_h = jnp.dot(attn.astype(matmul_dtype), vh,
                        preferred_element_type=jnp.float32)
        out_ref[:, h * d_v:(h + 1) * d_v] = out_h.astype(out_ref.dtype)


def _pick_block(total, target):
    """Largest q tile <= target that divides `total` and is a multiple of 8
    (sublane constraint); falls back to the full extent."""
    if total <= target:
        return total
    for cand in range(target, 7, -1):
        if total % cand == 0 and cand % 8 == 0:
            return cand
    return total


def multi_head_attention(q, k, v, w_q, w_k, w_v, *, block_q=256,
                         matmul_dtype=jnp.float32, attn_dtype=jnp.float32):
    """Forward pass of `_MultiHeadAttention` (eval mode, no mask)."""
    b, Lq, d_model = q.shape
    _, Lk, _ = k.shape
    n_heads, _, d_k = w_q.shape
    d_v = w_v.shape[2]
    inv_scale = 1.0 / math.sqrt(d_k)  # scale derived from w_q.shape[2]

    # Head-fused weight layout: (d_model, n_heads*d_k).
    wq_c = jnp.transpose(w_q, (1, 0, 2)).reshape(d_model, n_heads * d_k)
    wk_c = jnp.transpose(w_k, (1, 0, 2)).reshape(d_model, n_heads * d_k)
    wv_c = jnp.transpose(w_v, (1, 0, 2)).reshape(d_model, n_heads * d_v)

    # Cast big operands + weights once wrapper-side (halves HBM reads and runs
    # the MXU at its bf16 rate when matmul_dtype=bfloat16).
    q_in = q.astype(matmul_dtype)
    k_in = k.astype(matmul_dtype)
    v_in = v.astype(matmul_dtype)
    wq_c = wq_c.astype(matmul_dtype)
    wk_c = wk_c.astype(matmul_dtype)
    wv_c = wv_c.astype(matmul_dtype)

    bq = _pick_block(Lq, block_q)
    grid = (b, Lq // bq)  # batch outer, q tiles inner; heads fused in-kernel

    kernel = functools.partial(
        _mha_kernel,
        n_heads=n_heads, d_k=d_k, d_v=d_v, inv_scale=inv_scale,
        matmul_dtype=matmul_dtype,
        approx_recip=(jnp.dtype(matmul_dtype) != jnp.dtype(jnp.float32)),
    )

    q_spec = pl.BlockSpec((None, bq, d_model), lambda bi, qi: (bi, qi, 0))
    k_spec = pl.BlockSpec((None, Lk, d_model), lambda bi, qi: (bi, 0, 0))
    v_spec = pl.BlockSpec((None, Lk, d_model), lambda bi, qi: (bi, 0, 0))
    wq_spec = pl.BlockSpec((d_model, n_heads * d_k), lambda bi, qi: (0, 0))
    wk_spec = pl.BlockSpec((d_model, n_heads * d_k), lambda bi, qi: (0, 0))
    wv_spec = pl.BlockSpec((d_model, n_heads * d_v), lambda bi, qi: (0, 0))

    out_spec = pl.BlockSpec((None, bq, n_heads * d_v),
                            lambda bi, qi: (bi, qi, 0))
    attn_spec = pl.BlockSpec((n_heads, None, bq, Lk),
                             lambda bi, qi: (0, bi, qi, 0))

    out_cat, attn4 = pl.pallas_call(
        kernel,
        out_shape=(
            jax.ShapeDtypeStruct((b, Lq, n_heads * d_v), jnp.float32),
            jax.ShapeDtypeStruct((n_heads, b, Lq, Lk), attn_dtype),
        ),
        grid_spec=pltpu.PrefetchScalarGridSpec(
            num_scalar_prefetch=0,
            grid=grid,
            in_specs=[q_spec, k_spec, v_spec, wq_spec, wk_spec, wv_spec],
            out_specs=[out_spec, attn_spec],
            scratch_shapes=[
                pltpu.VMEM((Lk, n_heads * d_k), matmul_dtype),
                pltpu.VMEM((Lk, n_heads * d_v), matmul_dtype),
            ],
        ),
        compiler_params=pltpu.CompilerParams(
            # batch is shardable across TensorCores; the q-tile axis must stay
            # sequential because the K/V-projection scratch is filled at qi==0.
            dimension_semantics=("parallel", "arbitrary"),
            vmem_limit_bytes=48 * 1024 * 1024,
        ),
    )(q_in, k_in, v_in, wq_c, wk_c, wv_c)

    # Layout plumbing back to the torch module's conventions (outside kernel).
    out_heads = out_cat.reshape(b, Lq, n_heads, d_v).transpose(2, 0, 1, 3)
    attn = attn4.reshape(n_heads * b, Lq, Lk)
    return out_heads, attn


def _xavier_normal(key, shape):
    # torch.nn.init.xavier_normal on a (n_heads, d_model, d_out) tensor:
    # fan_in = d_model * d_out, fan_out = n_heads * d_out
    n_heads, d_model, d_out = shape
    fan_in = d_model * d_out
    fan_out = n_heads * d_out
    std = math.sqrt(2.0 / (fan_in + fan_out))
    return std * jax.random.normal(key, shape, dtype=jnp.float32)


def _reference(q, k, v, w_q, w_k, w_v):
    # Pure-JAX reference mirroring the PyTorch code.
    n_heads, _, d_k = w_q.shape
    b, Lq, _ = q.shape
    Lk = k.shape[1]
    d_v = w_v.shape[2]
    q_s = jnp.einsum('bld,hde->hble', q, w_q).reshape(n_heads * b, Lq, d_k)
    k_s = jnp.einsum('bld,hde->hble', k, w_k).reshape(n_heads * b, Lk, d_k)
    v_s = jnp.einsum('bld,hde->hble', v, w_v).reshape(n_heads * b, Lk, d_v)
    attn = jnp.einsum('nqe,nke->nqk', q_s, k_s) / math.sqrt(d_k)
    attn = jax.nn.softmax(attn, axis=-1)
    out = jnp.einsum('nqk,nkd->nqd', attn, v_s)
    return out, attn


if __name__ == "__main__":
    d_model = 32
    d_k = 16
    d_v = 16
    n_heads = 2
    batch = 2
    seq = 8

    key = jax.random.PRNGKey(0)
    kq, kk, kv, kwq, kwk, kwv = jax.random.split(key, 6)

    q = jax.random.normal(kq, (batch, seq, d_model), dtype=jnp.float32)
    k = jax.random.normal(kk, (batch, seq, d_model), dtype=jnp.float32)
    v = jax.random.normal(kv, (batch, seq, d_model), dtype=jnp.float32)

    w_q = _xavier_normal(kwq, (n_heads, d_model, d_k))
    w_k = _xavier_normal(kwk, (n_heads, d_model, d_k))
    w_v = _xavier_normal(kwv, (n_heads, d_model, d_v))

    # f32 path (torch-parity, exact reciprocal).
    out_heads, attn = multi_head_attention(q, k, v, w_q, w_k, w_v)
    jax.block_until_ready(out_heads)
    jax.block_until_ready(attn)

    ref_out, ref_attn = _reference(q, k, v, w_q, w_k, w_v)
    out_flat = out_heads.reshape(n_heads * batch, seq, d_v)
    assert out_flat.shape == (n_heads * batch, seq, d_v)
    assert attn.shape == (n_heads * batch, seq, seq)
    assert jnp.allclose(out_flat, ref_out, atol=1e-5, rtol=1e-5)
    assert jnp.allclose(attn, ref_attn, atol=1e-5, rtol=1e-5)

    # PyTorch-tuple API adaptation (torch.split(outputs, b_size, dim=0)),
    # done lazily at the caller instead of inside the hot path.
    outputs_split = tuple(out_heads)
    assert len(outputs_split) == n_heads
    assert outputs_split[0].shape == (batch, seq, d_v)

    # bf16 fast path (v6e/v7x): bf16 MXU inputs, f32 accumulation + softmax,
    # approx (EUP) reciprocal. Looser tolerance per reduced precision.
    out_heads_bf, attn_bf = multi_head_attention(
        q, k, v, w_q, w_k, w_v, matmul_dtype=jnp.bfloat16)
    jax.block_until_ready(out_heads_bf)
    assert jnp.allclose(out_heads_bf.reshape(n_heads * batch, seq, d_v),
                        ref_out, atol=5e-2, rtol=5e-2)
    assert jnp.allclose(attn_bf, ref_attn, atol=5e-2, rtol=5e-2)

    print("KERNEL_OK")
</pallas_src>

<mosaic_0001>
module attributes {stable_mosaic.version = 11 : i64} {
  func.func @_mha_kernel(%arg0: i32, %arg1: i32, %arg2: memref<1x8x32xf32, #tpu.memory_space<vmem>>, %arg3: memref<1x8x32xf32, #tpu.memory_space<vmem>>, %arg4: memref<1x8x32xf32, #tpu.memory_space<vmem>>, %arg5: memref<32x32xf32, #tpu.memory_space<vmem>>, %arg6: memref<32x32xf32, #tpu.memory_space<vmem>>, %arg7: memref<32x32xf32, #tpu.memory_space<vmem>>, %arg8: memref<1x8x32xf32, #tpu.memory_space<vmem>>, %arg9: memref<2x1x8x8xf32, #tpu.memory_space<vmem>>, %arg10: memref<8x32xf32, #tpu.memory_space<vmem>>, %arg11: memref<8x32xf32, #tpu.memory_space<vmem>>) attributes {dimension_semantics = [#tpu.dimension_semantics<parallel>, #tpu.dimension_semantics<arbitrary>], iteration_bounds = array<i64: 2, 1>, scalar_prefetch = 0 : i64, scratch_operands = 2 : i64, tpu.core_type = #tpu.core_type<tc>, window_params = [{transform_indices = @transform_0, window_bounds = array<i64: 1, 8, 32>}, {transform_indices = @transform_1, window_bounds = array<i64: 1, 8, 32>}, {transform_indices = @transform_2, window_bounds = array<i64: 1, 8, 32>}, {pipeline_mode = #tpu.pipeline_mode<synchronous>, transform_indices = @transform_3, window_bounds = array<i64: 32, 32>}, {pipeline_mode = #tpu.pipeline_mode<synchronous>, transform_indices = @transform_4, window_bounds = array<i64: 32, 32>}, {pipeline_mode = #tpu.pipeline_mode<synchronous>, transform_indices = @transform_5, window_bounds = array<i64: 32, 32>}, {transform_indices = @transform_6, window_bounds = array<i64: 1, 8, 32>}, {transform_indices = @transform_7, window_bounds = array<i64: 2, 1, 8, 8>}]} {
    %c0_i32 = arith.constant 0 : i32
    %0 = arith.cmpi eq, %arg1, %c0_i32 : i32
    %1 = arith.extui %0 : i1 to i32
    %c0_i32_0 = arith.constant 0 : i32
    %2 = arith.cmpi ne, %1, %c0_i32_0 : i32
    scf.if %2 {
      %c0_30 = arith.constant 0 : index
      %c0_31 = arith.constant 0 : index
      %c0_32 = arith.constant 0 : index
      %53 = vector.load %arg3[%c0_30, %c0_31, %c0_32] : memref<1x8x32xf32, #tpu.memory_space<vmem>>, vector<1x8x32xf32>
      %54 = vector.shape_cast %53 : vector<1x8x32xf32> to vector<8x32xf32>
      %c0_33 = arith.constant 0 : index
      %c0_34 = arith.constant 0 : index
      %55 = vector.load %arg6[%c0_33, %c0_34] : memref<32x32xf32, #tpu.memory_space<vmem>>, vector<32x32xf32>
      %cst_35 = arith.constant dense<0.000000e+00> : vector<8x32xf32>
      %56 = tpu.matmul %54, %55, %cst_35 {dimension_numbers = #tpu.dot_dimension_numbers<[1], [0], [0], [1], [0, 0, 1, 1], [], []>} : vector<8x32xf32>, vector<32x32xf32>, vector<8x32xf32> -> vector<8x32xf32>
      %c0_36 = arith.constant 0 : index
      %c0_37 = arith.constant 0 : index
      %57 = vector.load %arg10[%c0_36, %c0_37] : memref<8x32xf32, #tpu.memory_space<vmem>>, vector<8x32xf32>
      tpu.vector_store %arg10[%c0_36, %c0_37], %56 {strides = array<i32>} : memref<8x32xf32, #tpu.memory_space<vmem>>, vector<8x32xf32>,
      %c0_38 = arith.constant 0 : index
      %c0_39 = arith.constant 0 : index
      %c0_40 = arith.constant 0 : index
      %58 = vector.load %arg4[%c0_38, %c0_39, %c0_40] : memref<1x8x32xf32, #tpu.memory_space<vmem>>, vector<1x8x32xf32>
      %59 = vector.shape_cast %58 : vector<1x8x32xf32> to vector<8x32xf32>
      %c0_41 = arith.constant 0 : index
      %c0_42 = arith.constant 0 : index
      %60 = vector.load %arg7[%c0_41, %c0_42] : memref<32x32xf32, #tpu.memory_space<vmem>>, vector<32x32xf32>
      %cst_43 = arith.constant dense<0.000000e+00> : vector<8x32xf32>
      %61 = tpu.matmul %59, %60, %cst_43 {dimension_numbers = #tpu.dot_dimension_numbers<[1], [0], [0], [1], [0, 0, 1, 1], [], []>} : vector<8x32xf32>, vector<32x32xf32>, vector<8x32xf32> -> vector<8x32xf32>
      %c0_44 = arith.constant 0 : index
      %c0_45 = arith.constant 0 : index
      %62 = vector.load %arg11[%c0_44, %c0_45] : memref<8x32xf32, #tpu.memory_space<vmem>>, vector<8x32xf32>
      tpu.vector_store %arg11[%c0_44, %c0_45], %61 {strides = array<i32>} : memref<8x32xf32, #tpu.memory_space<vmem>>, vector<8x32xf32>,
    } else {
    }
    %c0 = arith.constant 0 : index
    %c0_1 = arith.constant 0 : index
    %c0_2 = arith.constant 0 : index
    %3 = vector.load %arg2[%c0, %c0_1, %c0_2] : memref<1x8x32xf32, #tpu.memory_space<vmem>>, vector<1x8x32xf32>
    %4 = vector.shape_cast %3 : vector<1x8x32xf32> to vector<8x32xf32>
    %c0_3 = arith.constant 0 : index
    %c0_4 = arith.constant 0 : index
    %5 = vector.load %arg5[%c0_3, %c0_4] : memref<32x32xf32, #tpu.memory_space<vmem>>, vector<32x32xf32>
    %cst = arith.constant dense<0.000000e+00> : vector<8x32xf32>
    %6 = tpu.matmul %4, %5, %cst {dimension_numbers = #tpu.dot_dimension_numbers<[1], [0], [0], [1], [0, 0, 1, 1], [], []>} : vector<8x32xf32>, vector<32x32xf32>, vector<8x32xf32> -> vector<8x32xf32>
    %cst_5 = arith.constant 2.500000e-01 : f32
    %7 = vector.broadcast %cst_5 : f32 to vector<8x32xf32>
    %8 = arith.mulf %6, %7 : vector<8x32xf32>
    %c0_6 = arith.constant 0 : index
    %c0_7 = arith.constant 0 : index
    %9 = vector.load %arg10[%c0_6, %c0_7] : memref<8x32xf32, #tpu.memory_space<vmem>>, vector<8x32xf32>
    %c0_8 = arith.constant 0 : index
    %c0_9 = arith.constant 0 : index
    %10 = vector.load %arg11[%c0_8, %c0_9] : memref<8x32xf32, #tpu.memory_space<vmem>>, vector<8x32xf32>
    %11 = vector.extract_strided_slice %8 {offsets = [0, 0], sizes = [8, 16], strides = [1, 1]} : vector<8x32xf32> to vector<8x16xf32>
    %12 = vector.extract_strided_slice %9 {offsets = [0, 0], sizes = [8, 16], strides = [1, 1]} : vector<8x32xf32> to vector<8x16xf32>
    %cst_10 = arith.constant dense<0.000000e+00> : vector<8x8xf32>
    %13 = tpu.matmul %11, %12, %cst_10 {dimension_numbers = #tpu.dot_dimension_numbers<[1], [1], [0], [0], [0, 0, 1, 0], [], []>} : vector<8x16xf32>, vector<8x16xf32>, vector<8x8xf32> -> vector<8x8xf32>
    %cst_11 = arith.constant dense<0xFF800000> : vector<8xf32>
    %14 = vector.multi_reduction <maximumf>, %13, %cst_11 [1] : vector<8x8xf32> to vector<8xf32>
    %15 = vector.shape_cast %14 : vector<8xf32> to vector<8x1xf32>
    %16 = vector.broadcast %15 : vector<8x1xf32> to vector<8x8xf32>
    %17 = arith.subf %13, %16 : vector<8x8xf32>
    %18 = math.exp %17 : vector<8x8xf32>
    %cst_12 = arith.constant dense<0.000000e+00> : vector<8xf32>
    %19 = vector.multi_reduction <add>, %18, %cst_12 [1] : vector<8x8xf32> to vector<8xf32>
    %20 = vector.shape_cast %19 : vector<8xf32> to vector<8x1xf32>
    %21 = tpu.reciprocal %20 : vector<8x1xf32> -> vector<8x1xf32>
    %22 = vector.broadcast %21 : vector<8x1xf32> to vector<8x8xf32>
    %23 = arith.mulf %18, %22 : vector<8x8xf32>
    %c0_13 = arith.constant 0 : index
    %c0_14 = arith.constant 0 : index
    %c0_15 = arith.constant 0 : index
    %c0_16 = arith.constant 0 : index
    %24 = vector.load %arg9[%c0_13, %c0_14, %c0_15, %c0_16] : memref<2x1x8x8xf32, #tpu.memory_space<vmem>>, vector<1x1x8x8xf32>
    %25 = vector.shape_cast %24 : vector<1x1x8x8xf32> to vector<8x8xf32>
    %26 = vector.shape_cast %23 : vector<8x8xf32> to vector<1x1x8x8xf32>
    tpu.vector_store %arg9[%c0_13, %c0_14, %c0_15, %c0_16], %26 {strides = array<i32>} : memref<2x1x8x8xf32, #tpu.memory_space<vmem>>, vector<1x1x8x8xf32>,
    %27 = vector.extract_strided_slice %10 {offsets = [0, 0], sizes = [8, 16], strides = [1, 1]} : vector<8x32xf32> to vector<8x16xf32>
    %cst_17 = arith.constant dense<0.000000e+00> : vector<8x16xf32>
    %28 = tpu.matmul %23, %27, %cst_17 {dimension_numbers = #tpu.dot_dimension_numbers<[1], [0], [0], [1], [0, 0, 1, 1], [], []>} : vector<8x8xf32>, vector<8x16xf32>, vector<8x16xf32> -> vector<8x16xf32>
    %c0_18 = arith.constant 0 : index
    %c0_19 = arith.constant 0 : index
    %c0_20 = arith.constant 0 : index
    %29 = vector.load %arg8[%c0_18, %c0_19, %c0_20] : memref<1x8x32xf32, #tpu.memory_space<vmem>>, vector<1x8x16xf32>
    %30 = vector.shape_cast %29 : vector<1x8x16xf32> to vector<8x16xf32>
    %31 = vector.shape_cast %28 : vector<8x16xf32> to vector<1x8x16xf32>
    tpu.vector_store %arg8[%c0_18, %c0_19, %c0_20], %31 {strides = array<i32>} : memref<1x8x32xf32, #tpu.memory_space<vmem>>, vector<1x8x16xf32>,
    %32 = vector.extract_strided_slice %8 {offsets = [0, 16], sizes = [8, 16], strides = [1, 1]} : vector<8x32xf32> to vector<8x16xf32>
    %33 = vector.extract_strided_slice %9 {offsets = [0, 16], sizes = [8, 16], strides = [1, 1]} : vector<8x32xf32> to vector<8x16xf32>
    %cst_21 = arith.constant dense<0.000000e+00> : vector<8x8xf32>
    %34 = tpu.matmul %32, %33, %cst_21 {dimension_numbers = #tpu.dot_dimension_numbers<[1], [1], [0], [0], [0, 0, 1, 0], [], []>} : vector<8x16xf32>, vector<8x16xf32>, vector<8x8xf32> -> vector<8x8xf32>
    %cst_22 = arith.constant dense<0xFF800000> : vector<8xf32>
    %35 = vector.multi_reduction <maximumf>, %34, %cst_22 [1] : vector<8x8xf32> to vector<8xf32>
    %36 = vector.shape_cast %35 : vector<8xf32> to vector<8x1xf32>
    %37 = vector.broadcast %36 : vector<8x1xf32> to vector<8x8xf32>
    %38 = arith.subf %34, %37 : vector<8x8xf32>
    %39 = math.exp %38 : vector<8x8xf32>
    %cst_23 = arith.constant dense<0.000000e+00> : vector<8xf32>
    %40 = vector.multi_reduction <add>, %39, %cst_23 [1] : vector<8x8xf32> to vector<8xf32>
    %41 = vector.shape_cast %40 : vector<8xf32> to vector<8x1xf32>
    %42 = tpu.reciprocal %41 : vector<8x1xf32> -> vector<8x1xf32>
    %43 = vector.broadcast %42 : vector<8x1xf32> to vector<8x8xf32>
    %44 = arith.mulf %39, %43 : vector<8x8xf32>
    %c1 = arith.constant 1 : index
    %c0_24 = arith.constant 0 : index
    %c0_25 = arith.constant 0 : index
    %c0_26 = arith.constant 0 : index
    %45 = vector.load %arg9[%c1, %c0_24, %c0_25, %c0_26] : memref<2x1x8x8xf32, #tpu.memory_space<vmem>>, vector<1x1x8x8xf32>
    %46 = vector.shape_cast %45 : vector<1x1x8x8xf32> to vector<8x8xf32>
    %47 = vector.shape_cast %44 : vector<8x8xf32> to vector<1x1x8x8xf32>
    tpu.vector_store %arg9[%c1, %c0_24, %c0_25, %c0_26], %47 {strides = array<i32>} : memref<2x1x8x8xf32, #tpu.memory_space<vmem>>, vector<1x1x8x8xf32>,
    %48 = vector.extract_strided_slice %10 {offsets = [0, 16], sizes = [8, 16], strides = [1, 1]} : vector<8x32xf32> to vector<8x16xf32>
    %cst_27 = arith.constant dense<0.000000e+00> : vector<8x16xf32>
    %49 = tpu.matmul %44, %48, %cst_27 {dimension_numbers = #tpu.dot_dimension_numbers<[1], [0], [0], [1], [0, 0, 1, 1], [], []>} : vector<8x8xf32>, vector<8x16xf32>, vector<8x16xf32> -> vector<8x16xf32>
    %c0_28 = arith.constant 0 : index
    %c0_29 = arith.constant 0 : index
    %c16 = arith.constant 16 : index
    %50 = vector.load %arg8[%c0_28, %c0_29, %c16] : memref<1x8x32xf32, #tpu.memory_space<vmem>>, vector<1x8x16xf32>
    %51 = vector.shape_cast %50 : vector<1x8x16xf32> to vector<8x16xf32>
    %52 = vector.shape_cast %49 : vector<8x16xf32> to vector<1x8x16xf32>
    tpu.vector_store %arg8[%c0_28, %c0_29, %c16], %52 {strides = array<i32>} : memref<1x8x32xf32, #tpu.memory_space<vmem>>, vector<1x8x16xf32>,
    return
  }
  func.func @transform_0(%arg0: i32, %arg1: i32) -> (i32, i32, i32) {
    %c0_i32 = arith.constant 0 : i32
    %c0_i32_0 = arith.constant 0 : i32
    return %arg0, %arg1, %c0_i32 : i32, i32, i32
  }
  func.func @transform_1(%arg0: i32, %arg1: i32) -> (i32, i32, i32) {
    %c0_i32 = arith.constant 0 : i32
    %c0_i32_0 = arith.constant 0 : i32
    %c0_i32_1 = arith.constant 0 : i32
    return %arg0, %c0_i32, %c0_i32_0 : i32, i32, i32
  }
  func.func @transform_2(%arg0: i32, %arg1: i32) -> (i32, i32, i32) {
    %c0_i32 = arith.constant 0 : i32
    %c0_i32_0 = arith.constant 0 : i32
    %c0_i32_1 = arith.constant 0 : i32
    return %arg0, %c0_i32, %c0_i32_0 : i32, i32, i32
  }
  func.func @transform_3(%arg0: i32, %arg1: i32) -> (i32, i32) {
    %c0_i32 = arith.constant 0 : i32
    %c0_i32_0 = arith.constant 0 : i32
    %c0_i32_1 = arith.constant 0 : i32
    return %c0_i32, %c0_i32_0 : i32, i32
  }
  func.func @transform_4(%arg0: i32, %arg1: i32) -> (i32, i32) {
    %c0_i32 = arith.constant 0 : i32
    %c0_i32_0 = arith.constant 0 : i32
    %c0_i32_1 = arith.constant 0 : i32
    return %c0_i32, %c0_i32_0 : i32, i32
  }
  func.func @transform_5(%arg0: i32, %arg1: i32) -> (i32, i32) {
    %c0_i32 = arith.constant 0 : i32
    %c0_i32_0 = arith.constant 0 : i32
    %c0_i32_1 = arith.constant 0 : i32
    return %c0_i32, %c0_i32_0 : i32, i32
  }
  func.func @transform_6(%arg0: i32, %arg1: i32) -> (i32, i32, i32) {
    %c0_i32 = arith.constant 0 : i32
    %c0_i32_0 = arith.constant 0 : i32
    return %arg0, %arg1, %c0_i32 : i32, i32, i32
  }
  func.func @transform_7(%arg0: i32, %arg1: i32) -> (i32, i32, i32, i32) {
    %c0_i32 = arith.constant 0 : i32
    %c0_i32_0 = arith.constant 0 : i32
    %c0_i32_1 = arith.constant 0 : i32
    return %c0_i32, %arg0, %arg1, %c0_i32_0 : i32, i32, i32, i32
  }
}

</mosaic_0001>

<llo_original>
// kernel: tpu_custom_call.1
$region0: #{tpu_custom_call.1}
  #allocation0 [shape = 'u32[]', space=smem, size = 0x4, offset = 0x4, fixed_abs, tag = 'smem constant byte address 0x4 - core index']
  #allocation1 [shape = 'u32[144,128]{1,0:T(1,128)}', space=vmem, size = 0x12000, scoped, tag = 'internal scratch']
  #allocation2 [shape = 'f32[8,32]{1,0:T(8,128)}', space=vmem, size = 0x1000, scoped, tag = 'scratch operand']
  #allocation3 [shape = 'f32[8,32]{1,0:T(8,128)}', space=vmem, size = 0x1000, scoped, tag = 'scratch operand']
  %s0 = inlined_call_operand.hbm [shape: f32[2,8,32], index: 0, kind: input, shape index: {}]
  %s1 = inlined_call_operand.hbm [shape: f32[2,8,32], index: 1, kind: input, shape index: {}]
  %s2 = inlined_call_operand.hbm [shape: f32[2,8,32], index: 2, kind: input, shape index: {}]
  %s3 = inlined_call_operand.hbm [shape: f32[32,32], index: 3, kind: input, shape index: {}]
  %s4 = inlined_call_operand.hbm [shape: f32[32,32], index: 4, kind: input, shape index: {}]
  %s5 = inlined_call_operand.hbm [shape: f32[32,32], index: 5, kind: input, shape index: {}]
  %s6 = inlined_call_operand.hbm [shape: f32[2,8,32], index: 6, kind: output, shape index: {0}]
  %s7 = inlined_call_operand.hbm [shape: f32[2,2,8,8], index: 7, kind: output, shape index: {1}]
  %8 = xla_tuple %s6, %s7
  %s9 = sld [smem:[#allocation0]]
  $region93: #{tpu_custom_call.1} parent=0
    _
  %s11 = ssub.s32 1, %s9
  %s12 = scalar_select 0, %s11, %s9
  $region1: #{tpu_custom_call.1} parent=0
    #allocation4 [shape = 'u8[8192]{0}', space=vmem, size = 0x2000, scoped, tag = 'input window, operand 0']
    #allocation5 [shape = 's32[2]{0}', space=sflag, size = 0x8, scoped, tag = 'scoped memory for tpu_custom_call.1']
    #allocation6 [shape = 's32[2]{0}', space=sflag, size = 0x8, scoped, tag = 'scoped memory for tpu_custom_call.1']
    #allocation7 [shape = 'u8[8192]{0}', space=vmem, size = 0x2000, scoped, tag = 'input window, operand 1']
    #allocation8 [shape = 's32[2]{0}', space=sflag, size = 0x8, scoped, tag = 'scoped memory for tpu_custom_call.1']
    #allocation9 [shape = 'u8[8192]{0}', space=vmem, size = 0x2000, scoped, tag = 'input window, operand 2']
    #allocation10 [shape = 'u8[16384]{0}', space=vmem, size = 0x4000, scoped, tag = 'input window, operand 3, single buffered']
    #allocation11 [shape = 's32[1]{0}', space=sflag, size = 0x4, scoped, tag = 'scoped memory for tpu_custom_call.1']
    #allocation12 [shape = 'u8[16384]{0}', space=vmem, size = 0x4000, scoped, tag = 'input window, operand 4, single buffered']
    #allocation13 [shape = 'u8[16384]{0}', space=vmem, size = 0x4000, scoped, tag = 'input window, operand 5, single buffered']
    #allocation14 [shape = 's32[1]{0}', space=sflag, size = 0x4, scoped, tag = 'scoped memory for tpu_custom_call.1']
    #allocation15 [shape = 'u8[8192]{0}', space=vmem, size = 0x2000, scoped, tag = 'output window, operand 0']
    #allocation16 [shape = 'u8[16384]{0}', space=vmem, size = 0x4000, scoped, tag = 'output window, operand 1']
    #allocation17 [shape = 's32[2]{0}', space=sflag, size = 0x8, scoped, tag = 'scoped memory for tpu_custom_call.1']
    %13 = vsyncpa [#allocation5], 0
    %s14 = scalar_lea.sflag [#allocation5], 1
    %15 = vsyncpa %s14, 0
    %16 = vsyncpa [#allocation8], 0
    %s17 = scalar_lea.sflag [#allocation8], 1
    %18 = vsyncpa %s17, 0
    %19 = vsyncpa [#allocation11], 0
    %20 = vsyncpa [#allocation14], 0
    %21 = vsyncpa [#allocation6], 0
    %s22 = scalar_lea.sflag [#allocation6], 1
    %23 = vsyncpa %s22, 0
    %24 = vsyncpa [#allocation17], 0
    %s25 = scalar_lea.sflag [#allocation17], 1
    %26 = vsyncpa %s25, 0
    loop: start=0, step=1, limit=4
    $region2: #{tpu_custom_call.1} parent=1 // loop_pre_header
      _
    $region3: #{tpu_custom_call.1} parent=1 // loop_header
      %s28 = sphi 0, %s32
      %p29 = scmp.ge.s32.totalorder %s28, 4
      %s35 = sphi 0, %s47
      %s36 = sphi 0, %s43
      %s37 = sphi 0, %s35
      %s38 = sphi 0, %s36
      %s39 = sphi 0, %s37
      %s40 = sphi 0, %s38
      %s52 = sphi 0, %s54
      %s55 = sphi 0, %s52
      %s56 = sphi 0, %s55
      %s72 = sphi 0, %s56
      %s78 = sphi 0, %s80
      %s81 = sphi 0, %s78
      %s82 = sphi 0, %s81
      %s98 = sphi 0, %s82
      %s104 = sphi 0, %s106
      %s107 = sphi 0, %s104
      %s108 = sphi 0, %s107
      %s124 = sphi 0, %s108
      %s128 = sphi 0, %s128
      %s130 = sphi 0, %s128
      %s131 = sphi 0, %s130
      %s145 = sphi 0, %s131
      %s149 = sphi 0, %s149
      %s151 = sphi 0, %s149
      %s152 = sphi 0, %s151
      %s166 = sphi 0, %s152
      %s170 = sphi 0, %s170
      %s172 = sphi 0, %s170
      %s173 = sphi 0, %s172
      %s187 = sphi 0, %s173
      %s195 = sphi 0, %s197
      %s198 = sphi 0, %s195
      %s199 = sphi 0, %s198
      %s215 = sphi 0, %s199
      %s223 = sphi 0, %s225
      %s226 = sphi 0, %s223
      %s227 = sphi 0, %s226
      %s243 = sphi 0, %s227
    $region4: #{tpu_custom_call.1} parent=1 // loop_header_branch
      %31 = sbr.rel (%p29) target = $region8
    $region5: #{tpu_custom_call.1} parent=1 // loop_body
      %s33 = ssub.s32 %s28, 1
      %s34 = ssub.s32 %s28, 2
      %s41 = sadd.s32 1, %s36
      %p42 = scmp.ge.s32.totalorder %s41, 1
      %s43 = scalar_select %p42, 0, %s41
      %s44 = sadd.s32 1, %s35
      %s45 = scalar_select %p42, %s44, %s35
      %p46 = scmp.ge.s32.totalorder %s45, 2
      %s47 = scalar_select %p46, 0, %s45
      %s48 = ssub.s32 %s35, %s47
      %s49 = ssub.s32 %s36, %s43
      %s50 = sor.u32 %s48, %s49
      %p51 = scmp.eq.s32.totalorder %s50, 0
      %s53 = sadd.s32 %s52, 1
      %s54 = scalar_select %p51, %s52, %s53
      %p57 = pneg %p51
      %p58 = scmp.eq.s32.totalorder %s28, 1
      %p59 = por %p57, %p58
      %p60 = scmp.ne.s32.totalorder %s52, %s55
      %p61 = scmp.eq.s32.totalorder %s28, 0
      %p62 = por %p60, %p61
      %p63 = scmp.ne.s32.totalorder %s52, %s55
      %p64 = scmp.eq.s32.totalorder %s33, 1
      %p65 = por %p63, %p64
      %p66 = scmp.ne.s32.totalorder %s55, %s56
      %p67 = scmp.eq.s32.totalorder %s33, 0
      %p68 = por %p66, %p67
      %p69 = scmp.ne.s32.totalorder %s55, %s56
      %p70 = scmp.eq.s32.totalorder %s34, 1
      %p71 = por %p69, %p70
      %p73 = scmp.ne.s32.totalorder %s56, %s72
      %p74 = scmp.eq.s32.totalorder %s34, 0
      %p75 = por %p73, %p74
      %s76 = ssub.s32 %s35, %s47
      %p77 = scmp.eq.s32.totalorder %s76, 0
      %s79 = sadd.s32 %s78, 1
      %s80 = scalar_select %p77, %s78, %s79
      %p83 = pneg %p77
      %p84 = scmp.eq.s32.totalorder %s28, 1
      %p85 = por %p83, %p84
      %p86 = scmp.ne.s32.totalorder %s78, %s81
      %p87 = scmp.eq.s32.totalorder %s28, 0
      %p88 = por %p86, %p87
      %p89 = scmp.ne.s32.totalorder %s78, %s81
      %p90 = scmp.eq.s32.totalorder %s33, 1
      %p91 = por %p89, %p90
      %p92 = scmp.ne.s32.totalorder %s81, %s82
      %p93 = scmp.eq.s32.totalorder %s33, 0
      %p94 = por %p92, %p93
      %p95 = scmp.ne.s32.totalorder %s81, %s82
      %p96 = scmp.eq.s32.totalorder %s34, 1
      %p97 = por %p95, %p96
      %p99 = scmp.ne.s32.totalorder %s82, %s98
      %p100 = scmp.eq.s32.totalorder %s34, 0
      %p101 = por %p99, %p100
      %s102 = ssub.s32 %s35, %s47
      %p103 = scmp.eq.s32.totalorder %s102, 0
      %s105 = sadd.s32 %s104, 1
      %s106 = scalar_select %p103, %s104, %s105
      %p109 = pneg %p103
      %p110 = scmp.eq.s32.totalorder %s28, 1
      %p111 = por %p109, %p110
      %p112 = scmp.ne.s32.totalorder %s104, %s107
      %p113 = scmp.eq.s32.totalorder %s28, 0
      %p114 = por %p112, %p113
      %p115 = scmp.ne.s32.totalorder %s104, %s107
      %p116 = scmp.eq.s32.totalorder %s33, 1
      %p117 = por %p115, %p116
      %p118 = scmp.ne.s32.totalorder %s107, %s108
      %p119 = scmp.eq.s32.totalorder %s33, 0
      %p120 = por %p118, %p119
      %p121 = scmp.ne.s32.totalorder %s107, %s108
      %p122 = scmp.eq.s32.totalorder %s34, 1
      %p123 = por %p121, %p122
      %p125 = scmp.ne.s32.totalorder %s108, %s124
      %p126 = scmp.eq.s32.totalorder %s34, 0
      %p127 = por %p125, %p126
      %s129 = sadd.s32 %s128, 1
      %p132 = scmp.eq.s32.totalorder %s28, 1
      %p133 = scmp.ne.s32.totalorder %s128, %s130
      %p134 = scmp.eq.s32.totalorder %s28, 0
      %p135 = por %p133, %p134
      %p136 = scmp.ne.s32.totalorder %s128, %s130
      %p137 = scmp.eq.s32.totalorder %s33, 1
      %p138 = por %p136, %p137
      %p139 = scmp.ne.s32.totalorder %s130, %s131
      %p140 = scmp.eq.s32.totalorder %s33, 0
      %p141 = por %p139, %p140
      %p142 = scmp.ne.s32.totalorder %s130, %s131
      %p143 = scmp.eq.s32.totalorder %s34, 1
      %p144 = por %p142, %p143
      %p146 = scmp.ne.s32.totalorder %s131, %s145
      %p147 = scmp.eq.s32.totalorder %s34, 0
      %p148 = por %p146, %p147
      %s150 = sadd.s32 %s149, 1
      %p153 = scmp.eq.s32.totalorder %s28, 1
      %p154 = scmp.ne.s32.totalorder %s149, %s151
      %p155 = scmp.eq.s32.totalorder %s28, 0
      %p156 = por %p154, %p155
      %p157 = scmp.ne.s32.totalorder %s149, %s151
      %p158 = scmp.eq.s32.totalorder %s33, 1
      %p159 = por %p157, %p158
      %p160 = scmp.ne.s32.totalorder %s151, %s152
      %p161 = scmp.eq.s32.totalorder %s33, 0
      %p162 = por %p160, %p161
      %p163 = scmp.ne.s32.totalorder %s151, %s152
      %p164 = scmp.eq.s32.totalorder %s34, 1
      %p165 = por %p163, %p164
      %p167 = scmp.ne.s32.totalorder %s152, %s166
      %p168 = scmp.eq.s32.totalorder %s34, 0
      %p169 = por %p167, %p168
      %s171 = sadd.s32 %s170, 1
      %p174 = scmp.eq.s32.totalorder %s28, 1
      %p175 = scmp.ne.s32.totalorder %s170, %s172
      %p176 = scmp.eq.s32.totalorder %s28, 0
      %p177 = por %p175, %p176
      %p178 = scmp.ne.s32.totalorder %s170, %s172
      %p179 = scmp.eq.s32.totalorder %s33, 1
      %p180 = por %p178, %p179
      %p181 = scmp.ne.s32.totalorder %s172, %s173
      %p182 = scmp.eq.s32.totalorder %s33, 0
      %p183 = por %p181, %p182
      %p184 = scmp.ne.s32.totalorder %s172, %s173
      %p185 = scmp.eq.s32.totalorder %s34, 1
      %p186 = por %p184, %p185
      %p188 = scmp.ne.s32.totalorder %s173, %s187
      %p189 = scmp.eq.s32.totalorder %s34, 0
      %p190 = por %p188, %p189
      %s191 = ssub.s32 %s35, %s47
      %s192 = ssub.s32 %s36, %s43
      %s193 = sor.u32 %s191, %s192
      %p194 = scmp.eq.s32.totalorder %s193, 0
      %s196 = sadd.s32 %s195, 1
      %s197 = scalar_select %p194, %s195, %s196
      %p200 = pneg %p194
      %p201 = scmp.eq.s32.totalorder %s28, 1
      %p202 = por %p200, %p201
      %p203 = scmp.ne.s32.totalorder %s195, %s198
      %p204 = scmp.eq.s32.totalorder %s28, 0
      %p205 = por %p203, %p204
      %p206 = scmp.ne.s32.totalorder %s195, %s198
      %p207 = scmp.eq.s32.totalorder %s33, 1
      %p208 = por %p206, %p207
      %p209 = scmp.ne.s32.totalorder %s198, %s199
      %p210 = scmp.eq.s32.totalorder %s33, 0
      %p211 = por %p209, %p210
      %p212 = scmp.ne.s32.totalorder %s198, %s199
      %p213 = scmp.eq.s32.totalorder %s34, 1
      %p214 = por %p212, %p213
      %p216 = scmp.ne.s32.totalorder %s199, %s215
      %p217 = scmp.eq.s32.totalorder %s34, 0
      %p218 = por %p216, %p217
      %s219 = ssub.s32 %s35, %s47
      %s220 = ssub.s32 %s36, %s43
      %s221 = sor.u32 %s219, %s220
      %p222 = scmp.eq.s32.totalorder %s221, 0
      %s224 = sadd.s32 %s223, 1
      %s225 = scalar_select %p222, %s223, %s224
      %p228 = pneg %p222
      %p229 = scmp.eq.s32.totalorder %s28, 1
      %p230 = por %p228, %p229
      %p231 = scmp.ne.s32.totalorder %s223, %s226
      %p232 = scmp.eq.s32.totalorder %s28, 0
      %p233 = por %p231, %p232
      %p234 = scmp.ne.s32.totalorder %s223, %s226
      %p235 = scmp.eq.s32.totalorder %s33, 1
      %p236 = por %p234, %p235
      %p237 = scmp.ne.s32.totalorder %s226, %s227
      %p238 = scmp.eq.s32.totalorder %s33, 0
      %p239 = por %p237, %p238
      %p240 = scmp.ne.s32.totalorder %s226, %s227
      %p241 = scmp.eq.s32.totalorder %s34, 1
      %p242 = por %p240, %p241
      %p244 = scmp.ne.s32.totalorder %s227, %s243
      %p245 = scmp.eq.s32.totalorder %s34, 0
      %p246 = por %p244, %p245
      %p247 = scmp.le.s32.totalorder 1, %s28
      %p248 = scmp.lt.s32.totalorder %s28, 3
      %p249 = pnand %p247, %p248
      %p250 = pneg %p249
      // Predicated region
      $region9: #{tpu_custom_call.1} parent=5 // pred_check
        _
      $region10: #{tpu_custom_call.1} parent=5 // pred_check_branch
        %252 = sbr.rel (%p249) target = $region12
      $region11: #{tpu_custom_call.1} parent=5 // pred_region
        %s253 = ssub.s32 %s28, 1
        // Predicated region
        $region13: #{tpu_custom_call.1} parent=11 // pred_check
          %p254 = pneg %p141
        $region14: #{tpu_custom_call.1} parent=11 // pred_check_branch
          %256 = sbr.rel (%p254) target = $region16
        $region15: #{tpu_custom_call.1} parent=11 // pred_region
          %s258 = ssub.s32 512, 512
          %259 = vsyncadd [#allocation11], %s258
          %s260 = sshll.u32 [#allocation10], 4
          %s261 = int_to_ptr.vmem [resolvable:$true] %s260
          %266 = dma.hbm_to_vmem [thread:$0]  %s3, 512, %s261, [#allocation11], 128, 128, 8
        $region16: #{tpu_custom_call.1} parent=11 // pred_fallthru
          _
        // Predicated region
        $region17: #{tpu_custom_call.1} parent=11 // pred_check
          %p267 = pneg %p162
        $region18: #{tpu_custom_call.1} parent=11 // pred_check_branch
          %269 = sbr.rel (%p267) target = $region20
        $region19: #{tpu_custom_call.1} parent=11 // pred_region
          %s271 = ssub.s32 512, 512
          %272 = vsyncadd [#allocation11], %s271
          %s273 = sshll.u32 [#allocation12], 4
          %s274 = int_to_ptr.vmem [resolvable:$true] %s273
          %279 = dma.hbm_to_vmem [thread:$0]  %s4, 512, %s274, [#allocation11], 128, 128, 8
        $region20: #{tpu_custom_call.1} parent=11 // pred_fallthru
          _
        // Predicated region
        $region21: #{tpu_custom_call.1} parent=11 // pred_check
          %p280 = pneg %p183
        $region22: #{tpu_custom_call.1} parent=11 // pred_check_branch
          %282 = sbr.rel (%p280) target = $region24
        $region23: #{tpu_custom_call.1} parent=11 // pred_region
          %s284 = ssub.s32 512, 512
          %285 = vsyncadd [#allocation14], %s284
          %s286 = sshll.u32 [#allocation13], 4
          %s287 = int_to_ptr.vmem [resolvable:$true] %s286
          %292 = dma.hbm_to_vmem [thread:$0]  %s5, 512, %s287, [#allocation14], 128, 128, 8
        $region24: #{tpu_custom_call.1} parent=11 // pred_fallthru
          _
      $region12: #{tpu_custom_call.1} parent=5 // pred_fallthru
        _
      %p293 = scmp.lt.s32.totalorder %s28, 2
      // Predicated region
      $region25: #{tpu_custom_call.1} parent=5 // pred_check
        %p294 = pneg %p293
      $region26: #{tpu_custom_call.1} parent=5 // pred_check_branch
        %296 = sbr.rel (%p294) target = $region28
      $region27: #{tpu_custom_call.1} parent=5 // pred_region
        // Predicated region
        $region29: #{tpu_custom_call.1} parent=27 // pred_check
          %p297 = pneg %p62
        $region30: #{tpu_custom_call.1} parent=27 // pred_check_branch
          %299 = sbr.rel (%p297) target = $region32
        $region31: #{tpu_custom_call.1} parent=27 // pred_region
          %s300 = sand.u32 %s52, 1
          %s301 = scalar_lea.sflag [#allocation5], %s300
          %s302 = sand.u32 %s52, 1
          %s303 = smul.addr %s302, 8
          %s304 = scalar_lea.vmem [#allocation4], %s303
          %s306 = ssub.s32 128, 128
          %307 = vsyncadd %s301, %s306
          %s308 = sadd.s32 %s36, %s35
          %s309 = smul.addr %s308, 128
          %s310 = scalar_lea.hbm %s0, %s309
          %s312 = sshll.u32 %s304, 4
          %s313 = int_to_ptr.vmem [resolvable:$true] %s312
          %315 = dma.hbm_to_vmem [thread:$0]  %s310, 128, %s313, %s301
        $region32: #{tpu_custom_call.1} parent=27 // pred_fallthru
          _
        // Predicated region
        $region33: #{tpu_custom_call.1} parent=27 // pred_check
          %p316 = pneg %p88
        $region34: #{tpu_custom_call.1} parent=27 // pred_check_branch
          %318 = sbr.rel (%p316) target = $region36
        $region35: #{tpu_custom_call.1} parent=27 // pred_region
          %s319 = sand.u32 %s28, 1
          %s320 = scalar_lea.sflag [#allocation8], %s319
          %s321 = sand.u32 %s78, 1
          %s322 = smul.addr %s321, 8
          %s323 = scalar_lea.vmem [#allocation7], %s322
          %s325 = ssub.s32 128, 128
          %326 = vsyncadd %s320, %s325
          %s327 = smul.addr %s35, 128
          %s328 = scalar_lea.hbm %s1, %s327
          %s330 = sshll.u32 %s323, 4
          %s331 = int_to_ptr.vmem [resolvable:$true] %s330
          %333 = dma.hbm_to_vmem [thread:$0]  %s328, 128, %s331, %s320
        $region36: #{tpu_custom_call.1} parent=27 // pred_fallthru
          _
        // Predicated region
        $region37: #{tpu_custom_call.1} parent=27 // pred_check
          %p334 = pneg %p114
        $region38: #{tpu_custom_call.1} parent=27 // pred_check_branch
          %336 = sbr.rel (%p334) target = $region40
        $region39: #{tpu_custom_call.1} parent=27 // pred_region
          %s337 = sand.u32 %s28, 1
          %s338 = scalar_lea.sflag [#allocation8], %s337
          %s339 = sand.u32 %s104, 1
          %s340 = smul.addr %s339, 8
          %s341 = scalar_lea.vmem [#allocation9], %s340
          %s343 = ssub.s32 128, 128
          %344 = vsyncadd %s338, %s343
          %s345 = smul.addr %s35, 128
          %s346 = scalar_lea.hbm %s2, %s345
          %s348 = sshll.u32 %s341, 4
          %s349 = int_to_ptr.vmem [resolvable:$true] %s348
          %351 = dma.hbm_to_vmem [thread:$0]  %s346, 128, %s349, %s338
        $region40: #{tpu_custom_call.1} parent=27 // pred_fallthru
          _
      $region28: #{tpu_custom_call.1} parent=5 // pred_fallthru
        _
      %p352 = scmp.le.s32.totalorder 1, %s28
      %p353 = scmp.lt.s32.totalorder %s28, 3
      %p354 = pnand %p352, %p353
      %p355 = pneg %p354
      // Predicated region
      $region41: #{tpu_custom_call.1} parent=5 // pred_check
        _
      $region42: #{tpu_custom_call.1} parent=5 // pred_check_branch
        %357 = sbr.rel (%p354) target = $region44
      $region43: #{tpu_custom_call.1} parent=5 // pred_region
        %s358 = ssub.s32 %s28, 1
        %s359 = sand.u32 %s55, 1
        %s360 = scalar_lea.sflag [#allocation5], %s359
        %s361 = sand.u32 %s55, 1
        %s362 = smul.addr %s361, 8
        %s363 = scalar_lea.vmem [#allocation4], %s362
        // Predicated region
        $region45: #{tpu_custom_call.1} parent=43 // pred_check
          %p364 = pneg %p68
        $region46: #{tpu_custom_call.1} parent=43 // pred_check_branch
          %366 = sbr.rel (%p364) target = $region48
        $region47: #{tpu_custom_call.1} parent=43 // pred_region
          %367 = dma.done %s360, 128
        $region48: #{tpu_custom_call.1} parent=43 // pred_fallthru
          _
        %s368 = sand.u32 %s33, 1
        %s369 = scalar_lea.sflag [#allocation8], %s368
        %s370 = sand.u32 %s81, 1
        %s371 = smul.addr %s370, 8
        %s372 = scalar_lea.vmem [#allocation7], %s371
        // Predicated region
        $region49: #{tpu_custom_call.1} parent=43 // pred_check
          %p373 = pneg %p94
        $region50: #{tpu_custom_call.1} parent=43 // pred_check_branch
          %375 = sbr.rel (%p373) target = $region52
        $region51: #{tpu_custom_call.1} parent=43 // pred_region
          %376 = dma.done %s369, 128
        $region52: #{tpu_custom_call.1} parent=43 // pred_fallthru
          _
        %s377 = sand.u32 %s33, 1
        %s378 = scalar_lea.sflag [#allocation8], %s377
        %s379 = sand.u32 %s107, 1
        %s380 = smul.addr %s379, 8
        %s381 = scalar_lea.vmem [#allocation9], %s380
        // Predicated region
        $region53: #{tpu_custom_call.1} parent=43 // pred_check
          %p382 = pneg %p120
        $region54: #{tpu_custom_call.1} parent=43 // pred_check_branch
          %384 = sbr.rel (%p382) target = $region56
        $region55: #{tpu_custom_call.1} parent=43 // pred_region
          %385 = dma.done %s378, 128
        $region56: #{tpu_custom_call.1} parent=43 // pred_fallthru
          _
        // Predicated region
        $region57: #{tpu_custom_call.1} parent=43 // pred_check
          %p386 = pneg %p141
        $region58: #{tpu_custom_call.1} parent=43 // pred_check_branch
          %388 = sbr.rel (%p386) target = $region60
        $region59: #{tpu_custom_call.1} parent=43 // pred_region
          %389 = dma.done [#allocation11], 512
        $region60: #{tpu_custom_call.1} parent=43 // pred_fallthru
          _
        // Predicated region
        $region61: #{tpu_custom_call.1} parent=43 // pred_check
          %p390 = pneg %p162
        $region62: #{tpu_custom_call.1} parent=43 // pred_check_branch
          %392 = sbr.rel (%p390) target = $region64
        $region63: #{tpu_custom_call.1} parent=43 // pred_region
          %393 = dma.done [#allocation11], 512
        $region64: #{tpu_custom_call.1} parent=43 // pred_fallthru
          _
        // Predicated region
        $region65: #{tpu_custom_call.1} parent=43 // pred_check
          %p394 = pneg %p183
        $region66: #{tpu_custom_call.1} parent=43 // pred_check_branch
          %396 = sbr.rel (%p394) target = $region68
        $region67: #{tpu_custom_call.1} parent=43 // pred_region
          %397 = dma.done [#allocation14], 512
        $region68: #{tpu_custom_call.1} parent=43 // pred_fallthru
          _
        %s398 = sand.u32 %s55, 1
        %s399 = scalar_lea.sflag [#allocation5], %s398
        %s400 = sand.u32 %s55, 1
        %s401 = smul.addr %s400, 8
        %s402 = scalar_lea.vmem [#allocation4], %s401
        %p403 = pneg %p68
        %p404 = pneg %p65
        %s405 = sand.u32 %s33, 1
        %s406 = scalar_lea.sflag [#allocation8], %s405
        %s407 = sand.u32 %s81, 1
        %s408 = smul.addr %s407, 8
        %s409 = scalar_lea.vmem [#allocation7], %s408
        %p410 = pneg %p94
        %p411 = pneg %p91
        %s412 = sand.u32 %s33, 1
        %s413 = scalar_lea.sflag [#allocation8], %s412
        %s414 = sand.u32 %s107, 1
        %s415 = smul.addr %s414, 8
        %s416 = scalar_lea.vmem [#allocation9], %s415
        %p417 = pneg %p120
        %p418 = pneg %p117
        %p419 = pneg %p141
        %p420 = pneg %p138
        %p421 = pneg %p162
        %p422 = pneg %p159
        %p423 = pneg %p183
        %p424 = pneg %p180
        %p425 = pneg %p211
        %p426 = pneg %p208
        %s427 = sand.u32 %s198, 1
        %s428 = scalar_lea.sflag [#allocation6], %s427
        %s429 = sand.u32 %s198, 1
        %s430 = smul.addr %s429, 8
        %s431 = scalar_lea.vmem [#allocation15], %s430
        %p432 = pneg %p239
        %p433 = pneg %p236
        %s434 = sand.u32 %s226, 1
        %s435 = scalar_lea.sflag [#allocation17], %s434
        %s436 = sand.u32 %s226, 1
        %s437 = smul.addr %s436, 16
        %s438 = scalar_lea.vmem [#allocation16], %s437
        %p439 = scmp.eq.s32.totalorder %s38, 0
        // Predicated region
        $region69: #{tpu_custom_call.1} parent=43 // pred_check
          %p440 = pneg %p439
        $region70: #{tpu_custom_call.1} parent=43 // pred_check_branch
          %442 = sbr.rel (%p440) target = $region72
        $region71: #{tpu_custom_call.1} parent=43 // pred_region
          %v443 = vld [vmem:[%s372] sm:$0xff]
          %v444 = vld [vmem:[#allocation12] sm:$0xff]
          %v445 = vld [vmem:[#allocation12 + $0x8] sm:$0xff]
          %v446 = vld [vmem:[#allocation12 + $0x10] sm:$0xff]
          %v447 = vld [vmem:[#allocation12 + $0x18] sm:$0xff]
          %vm448 = vcmask 261120
          %v450 = vsel %vm448, %v443, 0
          %452 = vmatprep.subr.mxu0 0.0
          %453 = vmatpush1.msra.mxu0 0.0
          %454 = vmatprep.subr.mxu0 0.0
          %455 = vmatpush1.msra.mxu0 0.0
          %456 = vmatprep.subr.mxu0 0.0
          %457 = vmatpush1.msra.mxu0 0.0
          %458 = vmatprep.subr.mxu0 0.0
          %459 = vmatpush1.msra.mxu0 0.0
          %460 = vmatprep.subr.mxu0 0.0
          %461 = vmatpush1.msra.mxu0 0.0
          %462 = vmatprep.subr.mxu0 0.0
          %463 = vmatpush1.msra.mxu0 0.0
          %464 = vmatprep.subr.mxu0 0.0
          %465 = vmatpush1.msra.mxu0 0.0
          %466 = vmatprep.subr.mxu0 0.0
          %467 = vmatpush1.msra.mxu0 0.0
          %468 = vmatprep.subr.mxu0 0.0
          %469 = vmatpush1.msra.mxu0 0.0
          %470 = vmatprep.subr.mxu0 0.0
          %471 = vmatpush1.msra.mxu0 0.0
          %472 = vmatprep.subr.mxu0 0.0
          %473 = vmatpush1.msra.mxu0 0.0
          %474 = vmatprep.subr.mxu0 0.0
          %475 = vmatpush1.msra.mxu0 0.0
          %476 = vmatprep.subr.mxu0 0.0
          %477 = vmatpush1.msra.mxu0 %v447
          %478 = vmatprep.subr.mxu0 0.0
          %479 = vmatpush1.msra.mxu0 %v446
          %480 = vmatprep.subr.mxu0 0.0
          %481 = vmatpush1.msra.mxu0 %v445
          %482 = vmatprep.subr.mxu0 0.0
          %483 = vmatpush1.msra.mxu0 %v444
          %484 = vmatprep.subr.mxu0 0.0
          %485 = vmatpush2.msra.mxu0 0.0
          %486 = vmatprep.subr.mxu0 0.0
          %487 = vmatpush2.msra.mxu0 0.0
          %488 = vmatprep.subr.mxu0 0.0
          %489 = vmatpush2.msra.mxu0 0.0
          %490 = vmatprep.subr.mxu0 0.0
          %491 = vmatpush2.msra.mxu0 0.0
          %492 = vmatprep.subr.mxu0 0.0
          %493 = vmatpush2.msra.mxu0 0.0
          %494 = vmatprep.subr.mxu0 0.0
          %495 = vmatpush2.msra.mxu0 0.0
          %496 = vmatprep.subr.mxu0 0.0
          %497 = vmatpush2.msra.mxu0 0.0
          %498 = vmatprep.subr.mxu0 0.0
          %499 = vmatpush2.msra.mxu0 0.0
          %500 = vmatprep.subr.mxu0 0.0
          %501 = vmatpush2.msra.mxu0 0.0
          %502 = vmatprep.subr.mxu0 0.0
          %503 = vmatpush2.msra.mxu0 0.0
          %504 = vmatprep.subr.mxu0 0.0
          %505 = vmatpush2.msra.mxu0 0.0
          %506 = vmatprep.subr.mxu0 0.0
          %507 = vmatpush2.msra.mxu0 0.0
          %508 = vmatprep.subr.mxu0 0.0
          %509 = vmatpush2.msra.mxu0 0.0
          %510 = vmatprep.subr.mxu0 0.0
          %511 = vmatpush2.msra.mxu0 0.0
          %512 = vmatprep.subr.mxu0 0.0
          %513 = vmatpush2.msra.mxu0 0.0
          %514 = vmatprep.subr.mxu0 0.0
          %515 = vmatpush2.msra.mxu0 0.0
          %516 = vmatprep.mubr.f32.mxu0 0.0
          %517 = vmatmul.mubr.f32.gmra.mxu0 %v450
          %v518 = vpop.f32.mrf.mxu0
          %v519 = vadd.f32 0.0, %v518
          %v520 = vpop.f32.mrf.mxu0
          %521 = vdwg.mxu0
          %522 = vst.msk [vmem:[#allocation2] sm:$0xff] %vm448, %v519
          %v523 = vld [vmem:[%s381] sm:$0xff]
          %v524 = vld [vmem:[#allocation13] sm:$0xff]
          %v525 = vld [vmem:[#allocation13 + $0x8] sm:$0xff]
          %v526 = vld [vmem:[#allocation13 + $0x10] sm:$0xff]
          %v527 = vld [vmem:[#allocation13 + $0x18] sm:$0xff]
          %v529 = vsel %vm448, %v523, 0
          %531 = vmatprep.subr.mxu0 0.0
          %532 = vmatpush1.msra.mxu0 0.0
          %533 = vmatprep.subr.mxu0 0.0
          %534 = vmatpush1.msra.mxu0 0.0
          %535 = vmatprep.subr.mxu0 0.0
          %536 = vmatpush1.msra.mxu0 0.0
          %537 = vmatprep.subr.mxu0 0.0
          %538 = vmatpush1.msra.mxu0 0.0
          %539 = vmatprep.subr.mxu0 0.0
          %540 = vmatpush1.msra.mxu0 0.0
          %541 = vmatprep.subr.mxu0 0.0
          %542 = vmatpush1.msra.mxu0 0.0
          %543 = vmatprep.subr.mxu0 0.0
          %544 = vmatpush1.msra.mxu0 0.0
          %545 = vmatprep.subr.mxu0 0.0
          %546 = vmatpush1.msra.mxu0 0.0
          %547 = vmatprep.subr.mxu0 0.0
          %548 = vmatpush1.msra.mxu0 0.0
          %549 = vmatprep.subr.mxu0 0.0
          %550 = vmatpush1.msra.mxu0 0.0
          %551 = vmatprep.subr.mxu0 0.0
          %552 = vmatpush1.msra.mxu0 0.0
          %553 = vmatprep.subr.mxu0 0.0
          %554 = vmatpush1.msra.mxu0 0.0
          %555 = vmatprep.subr.mxu0 0.0
          %556 = vmatpush1.msra.mxu0 %v527
          %557 = vmatprep.subr.mxu0 0.0
          %558 = vmatpush1.msra.mxu0 %v526
          %559 = vmatprep.subr.mxu0 0.0
          %560 = vmatpush1.msra.mxu0 %v525
          %561 = vmatprep.subr.mxu0 0.0
          %562 = vmatpush1.msra.mxu0 %v524
          %563 = vmatprep.subr.mxu0 0.0
          %564 = vmatpush2.msra.mxu0 0.0
          %565 = vmatprep.subr.mxu0 0.0
          %566 = vmatpush2.msra.mxu0 0.0
          %567 = vmatprep.subr.mxu0 0.0
          %568 = vmatpush2.msra.mxu0 0.0
          %569 = vmatprep.subr.mxu0 0.0
          %570 = vmatpush2.msra.mxu0 0.0
          %571 = vmatprep.subr.mxu0 0.0
          %572 = vmatpush2.msra.mxu0 0.0
          %573 = vmatprep.subr.mxu0 0.0
          %574 = vmatpush2.msra.mxu0 0.0
          %575 = vmatprep.subr.mxu0 0.0
          %576 = vmatpush2.msra.mxu0 0.0
          %577 = vmatprep.subr.mxu0 0.0
          %578 = vmatpush2.msra.mxu0 0.0
          %579 = vmatprep.subr.mxu0 0.0
          %580 = vmatpush2.msra.mxu0 0.0
          %581 = vmatprep.subr.mxu0 0.0
          %582 = vmatpush2.msra.mxu0 0.0
          %583 = vmatprep.subr.mxu0 0.0
          %584 = vmatpush2.msra.mxu0 0.0
          %585 = vmatprep.subr.mxu0 0.0
          %586 = vmatpush2.msra.mxu0 0.0
          %587 = vmatprep.subr.mxu0 0.0
          %588 = vmatpush2.msra.mxu0 0.0
          %589 = vmatprep.subr.mxu0 0.0
          %590 = vmatpush2.msra.mxu0 0.0
          %591 = vmatprep.subr.mxu0 0.0
          %592 = vmatpush2.msra.mxu0 0.0
          %593 = vmatprep.subr.mxu0 0.0
          %594 = vmatpush2.msra.mxu0 0.0
          %595 = vmatprep.mubr.f32.mxu0 0.0
          %596 = vmatmul.mubr.f32.gmra.mxu0 %v529
          %v597 = vpop.f32.mrf.mxu0
          %v598 = vadd.f32 0.0, %v597
          %v599 = vpop.f32.mrf.mxu0
          %600 = vdwg.mxu0
          %601 = vst.msk [vmem:[#allocation3] sm:$0xff] %vm448, %v598
        $region72: #{tpu_custom_call.1} parent=43 // pred_fallthru
          _
        %v602 = vld [vmem:[%s363] sm:$0xff]
        %v603 = vld [vmem:[#allocation10] sm:$0xff]
        %v604 = vld [vmem:[#allocation10 + $0x8] sm:$0xff]
        %v605 = vld [vmem:[#allocation10 + $0x10] sm:$0xff]
        %v606 = vld [vmem:[#allocation10 + $0x18] sm:$0xff]
        %vm607 = vcmask 261120
        %v609 = vsel %vm607, %v602, 0
        %611 = vmatprep.subr.mxu0 0.0
        %612 = vmatpush1.msra.mxu0 0.0
        %613 = vmatprep.subr.mxu0 0.0
        %614 = vmatpush1.msra.mxu0 0.0
        %615 = vmatprep.subr.mxu0 0.0
        %616 = vmatpush1.msra.mxu0 0.0
        %617 = vmatprep.subr.mxu0 0.0
        %618 = vmatpush1.msra.mxu0 0.0
        %619 = vmatprep.subr.mxu0 0.0
        %620 = vmatpush1.msra.mxu0 0.0
        %621 = vmatprep.subr.mxu0 0.0
        %622 = vmatpush1.msra.mxu0 0.0
        %623 = vmatprep.subr.mxu0 0.0
        %624 = vmatpush1.msra.mxu0 0.0
        %625 = vmatprep.subr.mxu0 0.0
        %626 = vmatpush1.msra.mxu0 0.0
        %627 = vmatprep.subr.mxu0 0.0
        %628 = vmatpush1.msra.mxu0 0.0
        %629 = vmatprep.subr.mxu0 0.0
        %630 = vmatpush1.msra.mxu0 0.0
        %631 = vmatprep.subr.mxu0 0.0
        %632 = vmatpush1.msra.mxu0 0.0
        %633 = vmatprep.subr.mxu0 0.0
        %634 = vmatpush1.msra.mxu0 0.0
        %635 = vmatprep.subr.mxu0 0.0
        %636 = vmatpush1.msra.mxu0 %v606
        %637 = vmatprep.subr.mxu0 0.0
        %638 = vmatpush1.msra.mxu0 %v605
        %639 = vmatprep.subr.mxu0 0.0
        %640 = vmatpush1.msra.mxu0 %v604
        %641 = vmatprep.subr.mxu0 0.0
        %642 = vmatpush1.msra.mxu0 %v603
        %643 = vmatprep.subr.mxu0 0.0
        %644 = vmatpush2.msra.mxu0 0.0
        %645 = vmatprep.subr.mxu0 0.0
        %646 = vmatpush2.msra.mxu0 0.0
        %647 = vmatprep.subr.mxu0 0.0
        %648 = vmatpush2.msra.mxu0 0.0
        %649 = vmatprep.subr.mxu0 0.0
        %650 = vmatpush2.msra.mxu0 0.0
        %651 = vmatprep.subr.mxu0 0.0
        %652 = vmatpush2.msra.mxu0 0.0
        %653 = vmatprep.subr.mxu0 0.0
        %654 = vmatpush2.msra.mxu0 0.0
        %655 = vmatprep.subr.mxu0 0.0
        %656 = vmatpush2.msra.mxu0 0.0
        %657 = vmatprep.subr.mxu0 0.0
        %658 = vmatpush2.msra.mxu0 0.0
        %659 = vmatprep.subr.mxu0 0.0
        %660 = vmatpush2.msra.mxu0 0.0
        %661 = vmatprep.subr.mxu0 0.0
        %662 = vmatpush2.msra.mxu0 0.0
        %663 = vmatprep.subr.mxu0 0.0
        %664 = vmatpush2.msra.mxu0 0.0
        %665 = vmatprep.subr.mxu0 0.0
        %666 = vmatpush2.msra.mxu0 0.0
        %667 = vmatprep.subr.mxu0 0.0
        %668 = vmatpush2.msra.mxu0 0.0
        %669 = vmatprep.subr.mxu0 0.0
        %670 = vmatpush2.msra.mxu0 0.0
        %671 = vmatprep.subr.mxu0 0.0
        %672 = vmatpush2.msra.mxu0 0.0
        %673 = vmatprep.subr.mxu0 0.0
        %674 = vmatpush2.msra.mxu0 0.0
        %675 = vmatprep.mubr.f32.mxu0 0.0
        %676 = vmatmul.mubr.f32.gmra.mxu0 %v609
        %v677 = vpop.f32.mrf.mxu0
        %v678 = vadd.f32 0.0, %v677
        %v679 = vpop.f32.mrf.mxu0
        %680 = vdwg.mxu0
        %v681 = vmul.f32 %v678, 0.25
        %v682 = vld [vmem:[#allocation2] sm:$0xff]
        %v683 = vld [vmem:[#allocation3] sm:$0xff]
        %vm684 = vcmask 130048
        %v686 = vsel %vm684, %v681, 0
        %v689 = vsel %vm684, %v682, 0
        %691 = vmatprep.subr.mxu0 0.0
        %692 = vmatpush1.xpose.msra.mxu0 0.0
        %693 = vmatprep.subr.mxu0 0.0
        %694 = vmatpush1.xpose.msra.mxu0 0.0
        %695 = vmatprep.subr.mxu0 0.0
        %696 = vmatpush1.xpose.msra.mxu0 0.0
        %697 = vmatprep.subr.mxu0 0.0
        %698 = vmatpush1.xpose.msra.mxu0 0.0
        %699 = vmatprep.subr.mxu0 0.0
        %700 = vmatpush1.xpose.msra.mxu0 0.0
        %701 = vmatprep.subr.mxu0 0.0
        %702 = vmatpush1.xpose.msra.mxu0 0.0
        %703 = vmatprep.subr.mxu0 0.0
        %704 = vmatpush1.xpose.msra.mxu0 0.0
        %705 = vmatprep.subr.mxu0 0.0
        %706 = vmatpush1.xpose.msra.mxu0 0.0
        %707 = vmatprep.subr.mxu0 0.0
        %708 = vmatpush1.xpose.msra.mxu0 0.0
        %709 = vmatprep.subr.mxu0 0.0
        %710 = vmatpush1.xpose.msra.mxu0 0.0
        %711 = vmatprep.subr.mxu0 0.0
        %712 = vmatpush1.xpose.msra.mxu0 0.0
        %713 = vmatprep.subr.mxu0 0.0
        %714 = vmatpush1.xpose.msra.mxu0 0.0
        %715 = vmatprep.subr.mxu0 0.0
        %716 = vmatpush1.xpose.msra.mxu0 0.0
        %717 = vmatprep.subr.mxu0 0.0
        %718 = vmatpush1.xpose.msra.mxu0 0.0
        %719 = vmatprep.subr.mxu0 0.0
        %720 = vmatpush1.xpose.msra.mxu0 0.0
        %721 = vmatprep.subr.mxu0 0.0
        %722 = vmatpush1.xpose.msra.mxu0 %v689
        %723 = vmatprep.subr.mxu0 0.0
        %724 = vmatpush2.xpose.msra.mxu0 0.0
        %725 = vmatprep.subr.mxu0 0.0
        %726 = vmatpush2.xpose.msra.mxu0 0.0
        %727 = vmatprep.subr.mxu0 0.0
        %728 = vmatpush2.xpose.msra.mxu0 0.0
        %729 = vmatprep.subr.mxu0 0.0
        %730 = vmatpush2.xpose.msra.mxu0 0.0
        %731 = vmatprep.subr.mxu0 0.0
        %732 = vmatpush2.xpose.msra.mxu0 0.0
        %733 = vmatprep.subr.mxu0 0.0
        %734 = vmatpush2.xpose.msra.mxu0 0.0
        %735 = vmatprep.subr.mxu0 0.0
        %736 = vmatpush2.xpose.msra.mxu0 0.0
        %737 = vmatprep.subr.mxu0 0.0
        %738 = vmatpush2.xpose.msra.mxu0 0.0
        %739 = vmatprep.subr.mxu0 0.0
        %740 = vmatpush2.xpose.msra.mxu0 0.0
        %741 = vmatprep.subr.mxu0 0.0
        %742 = vmatpush2.xpose.msra.mxu0 0.0
        %743 = vmatprep.subr.mxu0 0.0
        %744 = vmatpush2.xpose.msra.mxu0 0.0
        %745 = vmatprep.subr.mxu0 0.0
        %746 = vmatpush2.xpose.msra.mxu0 0.0
        %747 = vmatprep.subr.mxu0 0.0
        %748 = vmatpush2.xpose.msra.mxu0 0.0
        %749 = vmatprep.subr.mxu0 0.0
        %750 = vmatpush2.xpose.msra.mxu0 0.0
        %751 = vmatprep.subr.mxu0 0.0
        %752 = vmatpush2.xpose.msra.mxu0 0.0
        %753 = vmatprep.subr.mxu0 0.0
        %754 = vmatpush2.xpose.msra.mxu0 0.0
        %755 = vmatprep.mubr.f32.mxu0 0.0
        %756 = vmatmul.mubr.f32.gmra.mxu0 %v686
        %v757 = vpop.f32.mrf.mxu0
        %v758 = vadd.f32 0.0, %v757
        %v759 = vpop.f32.mrf.mxu0
        %760 = vdwg.mxu0
        %vm761 = vcmask 64512
        %v762 = vsel %vm761, %v758, -inf
        %763 = vmax.xlane.f32.xlu0 %v762
        %v764 = vpop.xlane.xlu0 %763
        %v765 = vsub.f32 %v758, %v764
        %v766 = vmul.f32 %v765, 1.442695
        %v767 = vpow.pop %v766
        %v768 = vsel %vm761, %v767, 0.0
        %769 = vadd.xlane.f32.xlu0 %v768
        %v770 = vpop.xlane.xlu0 %769
        %v771 = vrcp.pop %v770
        %v772 = vmul.f32 %v767, %v771
        %773 = vst.msk [vmem:[%s438] sm:$0xff] %vm761, %v772
        %v775 = vsel %vm761, %v772, 0
        %777 = vmatprep.subr.mxu0 0.0
        %778 = vmatpush1.msra.mxu0 0.0
        %779 = vmatprep.subr.mxu0 0.0
        %780 = vmatpush1.msra.mxu0 0.0
        %781 = vmatprep.subr.mxu0 0.0
        %782 = vmatpush1.msra.mxu0 0.0
        %783 = vmatprep.subr.mxu0 0.0
        %784 = vmatpush1.msra.mxu0 0.0
        %785 = vmatprep.subr.mxu0 0.0
        %786 = vmatpush1.msra.mxu0 0.0
        %787 = vmatprep.subr.mxu0 0.0
        %788 = vmatpush1.msra.mxu0 0.0
        %789 = vmatprep.subr.mxu0 0.0
        %790 = vmatpush1.msra.mxu0 0.0
        %791 = vmatprep.subr.mxu0 0.0
        %792 = vmatpush1.msra.mxu0 0.0
        %793 = vmatprep.subr.mxu0 0.0
        %794 = vmatpush1.msra.mxu0 0.0
        %795 = vmatprep.subr.mxu0 0.0
        %796 = vmatpush1.msra.mxu0 0.0
        %797 = vmatprep.subr.mxu0 0.0
        %798 = vmatpush1.msra.mxu0 0.0
        %799 = vmatprep.subr.mxu0 0.0
        %800 = vmatpush1.msra.mxu0 0.0
        %801 = vmatprep.subr.mxu0 0.0
        %802 = vmatpush1.msra.mxu0 0.0
        %803 = vmatprep.subr.mxu0 0.0
        %804 = vmatpush1.msra.mxu0 0.0
        %805 = vmatprep.subr.mxu0 0.0
        %806 = vmatpush1.msra.mxu0 0.0
        %807 = vmatprep.subr.mxu0 0.0
        %808 = vmatpush1.msra.mxu0 %v683
        %809 = vmatprep.subr.mxu0 0.0
        %810 = vmatpush2.msra.mxu0 0.0
        %811 = vmatprep.subr.mxu0 0.0
        %812 = vmatpush2.msra.mxu0 0.0
        %813 = vmatprep.subr.mxu0 0.0
        %814 = vmatpush2.msra.mxu0 0.0
        %815 = vmatprep.subr.mxu0 0.0
        %816 = vmatpush2.msra.mxu0 0.0
        %817 = vmatprep.subr.mxu0 0.0
        %818 = vmatpush2.msra.mxu0 0.0
        %819 = vmatprep.subr.mxu0 0.0
        %820 = vmatpush2.msra.mxu0 0.0
        %821 = vmatprep.subr.mxu0 0.0
        %822 = vmatpush2.msra.mxu0 0.0
        %823 = vmatprep.subr.mxu0 0.0
        %824 = vmatpush2.msra.mxu0 0.0
        %825 = vmatprep.subr.mxu0 0.0
        %826 = vmatpush2.msra.mxu0 0.0
        %827 = vmatprep.subr.mxu0 0.0
        %828 = vmatpush2.msra.mxu0 0.0
        %829 = vmatprep.subr.mxu0 0.0
        %830 = vmatpush2.msra.mxu0 0.0
        %831 = vmatprep.subr.mxu0 0.0
        %832 = vmatpush2.msra.mxu0 0.0
        %833 = vmatprep.subr.mxu0 0.0
        %834 = vmatpush2.msra.mxu0 0.0
        %835 = vmatprep.subr.mxu0 0.0
        %836 = vmatpush2.msra.mxu0 0.0
        %837 = vmatprep.subr.mxu0 0.0
        %838 = vmatpush2.msra.mxu0 0.0
        %839 = vmatprep.subr.mxu0 0.0
        %840 = vmatpush2.msra.mxu0 0.0
        %841 = vmatprep.mubr.f32.mxu0 0.0
        %842 = vmatmul.mubr.f32.gmra.mxu0 %v775
        %v843 = vpop.f32.mrf.mxu0
        %v844 = vadd.f32 0.0, %v843
        %v845 = vpop.f32.mrf.mxu0
        %846 = vdwg.mxu0
        %847 = vst.msk [vmem:[%s431] sm:$0xff] %vm684, %v844
        %848 = vrot.lane.b32.xlu0 %v681, 112
        %v849 = vpop.permute.xlu0 %848
        %850 = vrot.lane.b32.xlu0 %v682, 112
        %v851 = vpop.permute.xlu0 %850
        %v852 = vsel %vm684, %v849, 0
        %v854 = vsel %vm684, %v851, 0
        %856 = vmatprep.subr.mxu0 0.0
        %857 = vmatpush1.xpose.msra.mxu0 0.0
        %858 = vmatprep.subr.mxu0 0.0
        %859 = vmatpush1.xpose.msra.mxu0 0.0
        %860 = vmatprep.subr.mxu0 0.0
        %861 = vmatpush1.xpose.msra.mxu0 0.0
        %862 = vmatprep.subr.mxu0 0.0
        %863 = vmatpush1.xpose.msra.mxu0 0.0
        %864 = vmatprep.subr.mxu0 0.0
        %865 = vmatpush1.xpose.msra.mxu0 0.0
        %866 = vmatprep.subr.mxu0 0.0
        %867 = vmatpush1.xpose.msra.mxu0 0.0
        %868 = vmatprep.subr.mxu0 0.0
        %869 = vmatpush1.xpose.msra.mxu0 0.0
        %870 = vmatprep.subr.mxu0 0.0
        %871 = vmatpush1.xpose.msra.mxu0 0.0
        %872 = vmatprep.subr.mxu0 0.0
        %873 = vmatpush1.xpose.msra.mxu0 0.0
        %874 = vmatprep.subr.mxu0 0.0
        %875 = vmatpush1.xpose.msra.mxu0 0.0
        %876 = vmatprep.subr.mxu0 0.0
        %877 = vmatpush1.xpose.msra.mxu0 0.0
        %878 = vmatprep.subr.mxu0 0.0
        %879 = vmatpush1.xpose.msra.mxu0 0.0
        %880 = vmatprep.subr.mxu0 0.0
        %881 = vmatpush1.xpose.msra.mxu0 0.0
        %882 = vmatprep.subr.mxu0 0.0
        %883 = vmatpush1.xpose.msra.mxu0 0.0
        %884 = vmatprep.subr.mxu0 0.0
        %885 = vmatpush1.xpose.msra.mxu0 0.0
        %886 = vmatprep.subr.mxu0 0.0
        %887 = vmatpush1.xpose.msra.mxu0 %v854
        %888 = vmatprep.subr.mxu0 0.0
        %889 = vmatpush2.xpose.msra.mxu0 0.0
        %890 = vmatprep.subr.mxu0 0.0
        %891 = vmatpush2.xpose.msra.mxu0 0.0
        %892 = vmatprep.subr.mxu0 0.0
        %893 = vmatpush2.xpose.msra.mxu0 0.0
        %894 = vmatprep.subr.mxu0 0.0
        %895 = vmatpush2.xpose.msra.mxu0 0.0
        %896 = vmatprep.subr.mxu0 0.0
        %897 = vmatpush2.xpose.msra.mxu0 0.0
        %898 = vmatprep.subr.mxu0 0.0
        %899 = vmatpush2.xpose.msra.mxu0 0.0
        %900 = vmatprep.subr.mxu0 0.0
        %901 = vmatpush2.xpose.msra.mxu0 0.0
        %902 = vmatprep.subr.mxu0 0.0
        %903 = vmatpush2.xpose.msra.mxu0 0.0
        %904 = vmatprep.subr.mxu0 0.0
        %905 = vmatpush2.xpose.msra.mxu0 0.0
        %906 = vmatprep.subr.mxu0 0.0
        %907 = vmatpush2.xpose.msra.mxu0 0.0
        %908 = vmatprep.subr.mxu0 0.0
        %909 = vmatpush2.xpose.msra.mxu0 0.0
        %910 = vmatprep.subr.mxu0 0.0
        %911 = vmatpush2.xpose.msra.mxu0 0.0
        %912 = vmatprep.subr.mxu0 0.0
        %913 = vmatpush2.xpose.msra.mxu0 0.0
        %914 = vmatprep.subr.mxu0 0.0
        %915 = vmatpush2.xpose.msra.mxu0 0.0
        %916 = vmatprep.subr.mxu0 0.0
        %917 = vmatpush2.xpose.msra.mxu0 0.0
        %918 = vmatprep.subr.mxu0 0.0
        %919 = vmatpush2.xpose.msra.mxu0 0.0
        %920 = vmatprep.mubr.f32.mxu0 0.0
        %921 = vmatmul.mubr.f32.gmra.mxu0 %v852
        %v922 = vpop.f32.mrf.mxu0
        %v923 = vadd.f32 0.0, %v922
        %v924 = vpop.f32.mrf.mxu0
        %925 = vdwg.mxu0
        %v926 = vsel %vm761, %v923, -inf
        %927 = vmax.xlane.f32.xlu0 %v926
        %v928 = vpop.xlane.xlu0 %927
        %v929 = vsub.f32 %v923, %v928
        %v930 = vmul.f32 %v929, 1.442695
        %v931 = vpow.pop %v930
        %v932 = vsel %vm761, %v931, 0.0
        %933 = vadd.xlane.f32.xlu0 %v932
        %v934 = vpop.xlane.xlu0 %933
        %v935 = vrcp.pop %v934
        %v936 = vmul.f32 %v931, %v935
        %s937 = scalar_lea.vmem %s438, 8 [#allocation16]
        %938 = vst.msk [vmem:[%s937] sm:$0xff] %vm761, %v936
        %940 = vrot.lane.b32.xlu0 %v683, 112
        %v941 = vpop.permute.xlu0 %940
        %v944 = vsel %vm761, %v936, 0
        %946 = vmatprep.subr.mxu0 0.0
        %947 = vmatpush1.msra.mxu0 0.0
        %948 = vmatprep.subr.mxu0 0.0
        %949 = vmatpush1.msra.mxu0 0.0
        %950 = vmatprep.subr.mxu0 0.0
        %951 = vmatpush1.msra.mxu0 0.0
        %952 = vmatprep.subr.mxu0 0.0
        %953 = vmatpush1.msra.mxu0 0.0
        %954 = vmatprep.subr.mxu0 0.0
        %955 = vmatpush1.msra.mxu0 0.0
        %956 = vmatprep.subr.mxu0 0.0
        %957 = vmatpush1.msra.mxu0 0.0
        %958 = vmatprep.subr.mxu0 0.0
        %959 = vmatpush1.msra.mxu0 0.0
        %960 = vmatprep.subr.mxu0 0.0
        %961 = vmatpush1.msra.mxu0 0.0
        %962 = vmatprep.subr.mxu0 0.0
        %963 = vmatpush1.msra.mxu0 0.0
        %964 = vmatprep.subr.mxu0 0.0
        %965 = vmatpush1.msra.mxu0 0.0
        %966 = vmatprep.subr.mxu0 0.0
        %967 = vmatpush1.msra.mxu0 0.0
        %968 = vmatprep.subr.mxu0 0.0
        %969 = vmatpush1.msra.mxu0 0.0
        %970 = vmatprep.subr.mxu0 0.0
        %971 = vmatpush1.msra.mxu0 0.0
        %972 = vmatprep.subr.mxu0 0.0
        %973 = vmatpush1.msra.mxu0 0.0
        %974 = vmatprep.subr.mxu0 0.0
        %975 = vmatpush1.msra.mxu0 0.0
        %976 = vmatprep.subr.mxu0 0.0
        %977 = vmatpush1.msra.mxu0 %v941
        %978 = vmatprep.subr.mxu0 0.0
        %979 = vmatpush2.msra.mxu0 0.0
        %980 = vmatprep.subr.mxu0 0.0
        %981 = vmatpush2.msra.mxu0 0.0
        %982 = vmatprep.subr.mxu0 0.0
        %983 = vmatpush2.msra.mxu0 0.0
        %984 = vmatprep.subr.mxu0 0.0
        %985 = vmatpush2.msra.mxu0 0.0
        %986 = vmatprep.subr.mxu0 0.0
        %987 = vmatpush2.msra.mxu0 0.0
        %988 = vmatprep.subr.mxu0 0.0
        %989 = vmatpush2.msra.mxu0 0.0
        %990 = vmatprep.subr.mxu0 0.0
        %991 = vmatpush2.msra.mxu0 0.0
        %992 = vmatprep.subr.mxu0 0.0
        %993 = vmatpush2.msra.mxu0 0.0
        %994 = vmatprep.subr.mxu0 0.0
        %995 = vmatpush2.msra.mxu0 0.0
        %996 = vmatprep.subr.mxu0 0.0
        %997 = vmatpush2.msra.mxu0 0.0
        %998 = vmatprep.subr.mxu0 0.0
        %999 = vmatpush2.msra.mxu0 0.0
        %1000 = vmatprep.subr.mxu0 0.0
        %1001 = vmatpush2.msra.mxu0 0.0
        %1002 = vmatprep.subr.mxu0 0.0
        %1003 = vmatpush2.msra.mxu0 0.0
        %1004 = vmatprep.subr.mxu0 0.0
        %1005 = vmatpush2.msra.mxu0 0.0
        %1006 = vmatprep.subr.mxu0 0.0
        %1007 = vmatpush2.msra.mxu0 0.0
        %1008 = vmatprep.subr.mxu0 0.0
        %1009 = vmatpush2.msra.mxu0 0.0
        %1010 = vmatprep.mubr.f32.mxu0 0.0
        %1011 = vmatmul.mubr.f32.gmra.mxu0 %v944
        %v1012 = vpop.f32.mrf.mxu0
        %v1013 = vadd.f32 0.0, %v1012
        %v1014 = vpop.f32.mrf.mxu0
        %1015 = vdwg.mxu0
        %1017 = vrot.lane.b32.xlu0 %v1013, 16
        %v1018 = vpop.permute.xlu0 %1017
        %vm1020 = vcmask 261248
        %1021 = vst.msk [vmem:[%s431] sm:$0xff] %vm1020, %v1018
        %s1022 = sand.u32 %s198, 1
        %s1023 = scalar_lea.sflag [#allocation6], %s1022
        %s1024 = sand.u32 %s198, 1
        %s1025 = smul.addr %s1024, 8
        %s1026 = scalar_lea.vmem [#allocation15], %s1025
        %s1027 = sand.u32 %s226, 1
        %s1028 = scalar_lea.sflag [#allocation17], %s1027
        %s1029 = sand.u32 %s226, 1
        %s1030 = smul.addr %s1029, 16
        %s1031 = scalar_lea.vmem [#allocation16], %s1030
        // Predicated region
        $region73: #{tpu_custom_call.1} parent=43 // pred_check
          %p1032 = pneg %p208
        $region74: #{tpu_custom_call.1} parent=43 // pred_check_branch
          %1034 = sbr.rel (%p1032) target = $region76
        $region75: #{tpu_custom_call.1} parent=43 // pred_region
          %s1036 = ssub.s32 128, 128
          %1037 = vsyncadd %s1023, %s1036
          %s1038 = sadd.s32 %s38, %s37
          %s1039 = smul.addr %s1038, 128
          %s1040 = scalar_lea.hbm %s6, %s1039
          %s1042 = sshll.u32 %s1026, 4
          %s1043 = int_to_ptr.vmem [resolvable:$true] %s1042
          %1045 = dma.vmem_to_hbm [thread:$0]  %s1043, 128, %s1040, %s1023
        $region76: #{tpu_custom_call.1} parent=43 // pred_fallthru
          _
        // Predicated region
        $region77: #{tpu_custom_call.1} parent=43 // pred_check
          %p1046 = pneg %p236
        $region78: #{tpu_custom_call.1} parent=43 // pred_check_branch
          %1048 = sbr.rel (%p1046) target = $region80
        $region79: #{tpu_custom_call.1} parent=43 // pred_region
          %s1050 = ssub.s32 256, 256
          %1051 = vsyncadd %s1028, %s1050
          %s1052 = sadd.s32 %s38, %s37
          %s1053 = smul.addr %s1052, 128
          %s1054 = scalar_lea.hbm %s7, %s1053
          %s1055 = sshll.u32 %s1031, 4
          %s1056 = int_to_ptr.vmem [resolvable:$true] %s1055
          %1061 = dma.vmem_to_hbm [thread:$0]  %s1056, 256, %s1054, %s1028, 128, 256, 8
        $region80: #{tpu_custom_call.1} parent=43 // pred_fallthru
          _
      $region44: #{tpu_custom_call.1} parent=5 // pred_fallthru
        _
      %p1062 = scmp.le.s32.totalorder 2, %s28
      // Predicated region
      $region81: #{tpu_custom_call.1} parent=5 // pred_check
        %p1063 = pneg %p1062
      $region82: #{tpu_custom_call.1} parent=5 // pred_check_branch
        %1065 = sbr.rel (%p1063) target = $region84
      $region83: #{tpu_custom_call.1} parent=5 // pred_region
        %s1066 = ssub.s32 %s28, 2
        // Predicated region
        $region85: #{tpu_custom_call.1} parent=83 // pred_check
          %p1067 = pneg %p214
        $region86: #{tpu_custom_call.1} parent=83 // pred_check_branch
          %1069 = sbr.rel (%p1067) target = $region88
        $region87: #{tpu_custom_call.1} parent=83 // pred_region
          %s1070 = sand.u32 %s199, 1
          %s1071 = scalar_lea.sflag [#allocation6], %s1070
          %s1072 = sand.u32 %s199, 1
          %s1073 = smul.addr %s1072, 8
          %s1074 = scalar_lea.vmem [#allocation15], %s1073
          %1075 = dma.done %s1071, 128
        $region88: #{tpu_custom_call.1} parent=83 // pred_fallthru
          _
        // Predicated region
        $region89: #{tpu_custom_call.1} parent=83 // pred_check
          %p1076 = pneg %p242
        $region90: #{tpu_custom_call.1} parent=83 // pred_check_branch
          %1078 = sbr.rel (%p1076) target = $region92
        $region91: #{tpu_custom_call.1} parent=83 // pred_region
          %s1079 = sand.u32 %s227, 1
          %s1080 = scalar_lea.sflag [#allocation17], %s1079
          %s1081 = sand.u32 %s227, 1
          %s1082 = smul.addr %s1081, 16
          %s1083 = scalar_lea.vmem [#allocation16], %s1082
          %1084 = dma.done %s1080, 256
        $region92: #{tpu_custom_call.1} parent=83 // pred_fallthru
          _
      $region84: #{tpu_custom_call.1} parent=5 // pred_fallthru
        _
    $region6: #{tpu_custom_call.1} parent=1 // loop_footer
      %s32 = sadd.s32 1, %s28
    $region7: #{tpu_custom_call.1} parent=1 // loop_footer_branch
      %27 = sbr.rel target = $region3
    $region8: #{tpu_custom_call.1} parent=1 // loop_exit
      _
    %1085 = vsyncpa [#allocation5], 1
    %s1086 = scalar_lea.sflag [#allocation5], 1
    %1087 = vsyncpa %s1086, 1
    %1088 = vsyncpa [#allocation8], 1
    %s1089 = scalar_lea.sflag [#allocation8], 1
    %1090 = vsyncpa %s1089, 1
    %1091 = vsyncpa [#allocation11], 1
    %1092 = vsyncpa [#allocation14], 1
    %1093 = vsyncpa [#allocation6], 1
    %s1094 = scalar_lea.sflag [#allocation6], 1
    %1095 = vsyncpa %s1094, 1
    %1096 = vsyncpa [#allocation17], 1
    %s1097 = scalar_lea.sflag [#allocation17], 1
    %1098 = vsyncpa %s1097, 1

</llo_original>
